<compile_context>
chip_gen: v5e
topology: v5e:2x2
jax: 0.10.0
libtpu: 0.0.40
codegen_flags: <defaults>
</compile_context>

<pallas_src>
import jax
import jax.numpy as jnp
from jax.experimental import pallas as pl
from jax.experimental.pallas import tpu as pltpu


def _calibrator_kernel(x_ref, w_ref, o_ref):
    # x_ref: (TM, H) row tile, w_ref: (1, H) weight (PyTorch layout), o_ref: (1, TM).
    # Contract the hidden (lane) axis of both operands: (1, H) . (TM, H)^T -> (1, TM).
    logits = jax.lax.dot_general(
        w_ref[...],
        x_ref[...],
        dimension_numbers=(((1,), (1,)), ((), ())),
        preferred_element_type=jnp.float32,
    )
    o_ref[...] = jax.nn.sigmoid(logits).astype(o_ref.dtype)


def _round_up(x, m):
    return -(-x // m) * m


def _round_down(x, m):
    return (x // m) * m


def calibrator_forward(hidden_states, weight, *, target_block_bytes=8 * 1024 * 1024):
    """hidden_states: (B, S, H); weight: (1, H) (PyTorch Linear(H, 1, bias=False)).

    Returns (sigmoid(hidden_states @ weight.T), None), matching the nn.Module.
    """
    B, S, H = hidden_states.shape
    N = B * S
    dtype = hidden_states.dtype
    itemsize = jnp.dtype(dtype).itemsize

    # VMEM lane dim is padded to 128; sublane packing depends on dtype width.
    h_pad = _round_up(H, 128)
    sub = (8 * 4) // itemsize          # 8 (f32) / 16 (bf16) / 32 (int8/fp8)
    row_bytes = h_pad * itemsize       # VMEM-resident bytes per activation row

    # Row tile sized by (lane-padded) VMEM bytes, not rows; aligned to 128 rows so
    # the input sublane dim and the lane-dense output block are unmasked for every
    # dtype.  Cap so the double-buffered tile stays well inside v7x's 64 MiB VMEM.
    max_tile_bytes = min(int(target_block_bytes), 20 * 1024 * 1024)
    tm = _round_down(max(1, max_tile_bytes // row_bytes), 128)
    tm = max(128, tm)

    n_rows_sub = _round_up(N, sub)
    if n_rows_sub <= tm:
        # Single tile: shrink to the sublane-rounded row count; the output block
        # then spans the full lane extent, so 128-alignment is not required.
        tm = n_rows_sub
    else:
        # Multi-tile: keep >= ~8 grid steps so v7x's two TensorCores both get work
        # and the pipeline can hide DMA ramp-up — but only while tiles stay >= ~1 MiB
        # (below that, the ~0.35 us per-step overhead dominates instead).
        cap = _round_down(N // 8, 128)
        if cap >= 128 and cap * row_bytes >= (1 << 20):
            tm = min(tm, cap)

    n_tiles = pl.cdiv(N, tm)
    out_cols = n_tiles * tm

    # No input padding / copy: stream the activations as-is.
    x2d = hidden_states.reshape(N, H)
    # Keep the PyTorch (1, H) weight layout.  Cast to the activation dtype so the
    # dot lowers cleanly; accumulation stays in f32 via preferred_element_type.
    # TODO(synk): keep the weight in f32 (mixed-precision dot) if exact bit
    # fidelity to an f32 PyTorch weight with bf16 activations is required.
    w = weight.reshape(1, H).astype(dtype)

    # VMEM limit from the real lane-padded, double-buffered footprint (+ margin),
    # kept under 48 MiB so it is safe on v7x (64 MiB physical) as well as v5e/v6e.
    in_blk = tm * row_bytes
    out_blk = 8 * _round_up(tm, 128) * itemsize
    w_blk = 8 * row_bytes
    footprint = 2 * (in_blk + out_blk + w_blk)
    vmem_limit = int(min(48 * 1024 * 1024,
                         max(footprint + 4 * 1024 * 1024, 16 * 1024 * 1024)))

    out = pl.pallas_call(
        _calibrator_kernel,
        out_shape=jax.ShapeDtypeStruct((1, out_cols), dtype),
        grid_spec=pltpu.PrefetchScalarGridSpec(
            num_scalar_prefetch=0,
            grid=(n_tiles,),
            in_specs=[
                pl.BlockSpec((tm, H), lambda i: (i, 0)),   # streamed row tiles (ragged tail OK)
                pl.BlockSpec((1, H), lambda i: (0, 0)),    # weight, resident in VMEM
            ],
            out_specs=pl.BlockSpec((1, tm), lambda i: (0, i)),  # lane-dense output slab
        ),
        compiler_params=pltpu.CompilerParams(
            dimension_semantics=("parallel",),  # shards rows across v7x's two TCs
            vmem_limit_bytes=vmem_limit,
        ),
    )(x2d, w)

    # Slice off the padded tail (never read downstream) and restore (B, S, 1).
    probs = out.reshape(out_cols)[:N].reshape(B, S, 1)
    # The PyTorch module returns a (sigmoid_output, None) tuple.
    return probs, None


if __name__ == "__main__":
    key = jax.random.PRNGKey(0)
    k_x, k_w = jax.random.split(key)

    # Small shapes consistent with the module: (batch=2, seq=8, hidden=32).
    B, S, H = 2, 8, 32
    hidden_states = jax.random.normal(k_x, (B, S, H), dtype=jnp.float32)
    # Deterministic init for Linear(hidden_size, 1, bias=False) weight: shape (1, H).
    weight = jax.random.normal(k_w, (1, H), dtype=jnp.float32) * (1.0 / jnp.sqrt(H))

    probs, extra = calibrator_forward(hidden_states, weight)
    jax.block_until_ready(probs)

    ref = jax.nn.sigmoid(hidden_states @ weight.T)
    assert probs.shape == (B, S, 1)
    assert extra is None
    assert jnp.allclose(probs, ref, atol=1e-5, rtol=1e-5)

    # Exercise the multi-tile + ragged-last-block path with a small forced row tile.
    B2, S2 = 3, 67  # N = 201 -> 2 tiles of 128 rows; last block is ragged (no input pad)
    hs2 = jax.random.normal(jax.random.PRNGKey(1), (B2, S2, H), dtype=jnp.float32)
    probs2, _ = calibrator_forward(hs2, weight, target_block_bytes=128 * H * 4)
    jax.block_until_ready(probs2)
    ref2 = jax.nn.sigmoid(hs2 @ weight.T)
    assert probs2.shape == (B2, S2, 1)
    assert jnp.allclose(probs2, ref2, atol=1e-5, rtol=1e-5)

    print("KERNEL_OK")
</pallas_src>

<mosaic_0001>
module attributes {stable_mosaic.version = 11 : i64} {
  func.func @_calibrator_kernel(%arg0: i32, %arg1: memref<16x32xf32, #tpu.memory_space<vmem>>, %arg2: memref<1x32xf32, #tpu.memory_space<vmem>>, %arg3: memref<1x16xf32, #tpu.memory_space<vmem>>) attributes {dimension_semantics = [#tpu.dimension_semantics<parallel>], iteration_bounds = array<i64: 1>, scalar_prefetch = 0 : i64, scratch_operands = 0 : i64, tpu.core_type = #tpu.core_type<tc>, window_params = [{transform_indices = @transform_0, window_bounds = array<i64: 16, 32>}, {pipeline_mode = #tpu.pipeline_mode<synchronous>, transform_indices = @transform_1, window_bounds = array<i64: 1, 32>}, {transform_indices = @transform_2, window_bounds = array<i64: 1, 16>}]} {
    %c0 = arith.constant 0 : index
    %c0_0 = arith.constant 0 : index
    %0 = vector.load %arg2[%c0, %c0_0] : memref<1x32xf32, #tpu.memory_space<vmem>>, vector<1x32xf32>
    %c0_1 = arith.constant 0 : index
    %c0_2 = arith.constant 0 : index
    %1 = vector.load %arg1[%c0_1, %c0_2] : memref<16x32xf32, #tpu.memory_space<vmem>>, vector<16x32xf32>
    %cst = arith.constant dense<0.000000e+00> : vector<1x16xf32>
    %2 = tpu.matmul %0, %1, %cst {dimension_numbers = #tpu.dot_dimension_numbers<[1], [1], [0], [0], [0, 0, 1, 0], [], []>} : vector<1x32xf32>, vector<16x32xf32>, vector<1x16xf32> -> vector<1x16xf32>
    %3 = arith.negf %2 : vector<1x16xf32>
    %4 = math.exp %3 : vector<1x16xf32>
    %cst_3 = arith.constant 1.000000e+00 : f32
    %5 = vector.broadcast %cst_3 : f32 to vector<1x16xf32>
    %6 = arith.addf %5, %4 : vector<1x16xf32>
    %7 = arith.divf %5, %6 : vector<1x16xf32>
    %c0_4 = arith.constant 0 : index
    %c0_5 = arith.constant 0 : index
    %8 = vector.load %arg3[%c0_4, %c0_5] : memref<1x16xf32, #tpu.memory_space<vmem>>, vector<1x16xf32>
    tpu.vector_store %arg3[%c0_4, %c0_5], %7 {strides = array<i32>} : memref<1x16xf32, #tpu.memory_space<vmem>>, vector<1x16xf32>,
    return
  }
  func.func @transform_0(%arg0: i32) -> (i32, i32) {
    %c0_i32 = arith.constant 0 : i32
    %c0_i32_0 = arith.constant 0 : i32
    return %arg0, %c0_i32 : i32, i32
  }
  func.func @transform_1(%arg0: i32) -> (i32, i32) {
    %c0_i32 = arith.constant 0 : i32
    %c0_i32_0 = arith.constant 0 : i32
    %c0_i32_1 = arith.constant 0 : i32
    return %c0_i32, %c0_i32_0 : i32, i32
  }
  func.func @transform_2(%arg0: i32) -> (i32, i32) {
    %c0_i32 = arith.constant 0 : i32
    %c0_i32_0 = arith.constant 0 : i32
    return %c0_i32, %arg0 : i32, i32
  }
}

</mosaic_0001>

<llo_original>
// kernel: tpu_custom_call.1
$region0: #{tpu_custom_call.1}
  #allocation0 [shape = 'u32[]', space=smem, size = 0x4, offset = 0x4, fixed_abs, tag = 'smem constant byte address 0x4 - core index']
  #allocation1 [shape = 'u32[72,128]{1,0:T(1,128)}', space=vmem, size = 0x9000, scoped, tag = 'internal scratch']
  %s0 = inlined_call_operand.hbm [shape: f32[16,32], index: 0, kind: input, shape index: {}]
  %s1 = inlined_call_operand.hbm [shape: f32[1,32], index: 1, kind: input, shape index: {}]
  %s2 = inlined_call_operand.hbm [shape: f32[1,16], index: 2, kind: output, shape index: {}]
  %s3 = sld [smem:[#allocation0]]
  $region26: #{tpu_custom_call.1} parent=0
    _
  %s5 = ssub.s32 1, %s3
  %s6 = scalar_select 0, %s5, %s3
  $region1: #{tpu_custom_call.1} parent=0
    #allocation2 [shape = 'u8[8192]{0}', space=vmem, size = 0x2000, scoped, tag = 'input window, operand 0, single buffered']
    #allocation3 [shape = 's32[1]{0}', space=sflag, size = 0x4, scoped, tag = 'scoped memory for tpu_custom_call.1']
    #allocation4 [shape = 's32[1]{0}', space=sflag, size = 0x4, scoped, tag = 'scoped memory for tpu_custom_call.1']
    #allocation5 [shape = 'u8[512]{0}', space=vmem, size = 0x400, scoped, tag = 'input window, operand 1, single buffered']
    #allocation6 [shape = 's32[1]{0}', space=sflag, size = 0x4, scoped, tag = 'scoped memory for tpu_custom_call.1']
    #allocation7 [shape = 'u8[512]{0}', space=vmem, size = 0x400, scoped, tag = 'output window, operand 0, single buffered']
    %7 = vsyncpa [#allocation3], 0
    %8 = vsyncpa [#allocation6], 0
    %9 = vsyncpa [#allocation4], 0
    // Predicated region
    $region2: #{tpu_custom_call.1} parent=1 // pred_check
      _
    $region3: #{tpu_custom_call.1} parent=1 // pred_check_branch
      %11 = sbr.rel (0) target = $region5
    $region4: #{tpu_custom_call.1} parent=1 // pred_region
      %13 = vsyncadd [#allocation3], 0
      %s14 = sshll.u32 %s0, 4
      %s15 = int_to_ptr.hbm [resolvable:$true] %s14
      %s16 = sshll.u32 [#allocation2], 4
      %s17 = int_to_ptr.vmem [resolvable:$true] %s16
      %22 = dma.hbm_to_vmem [thread:$0]  %s15, 256, %s17, [#allocation3], 128, 128, 8
    $region5: #{tpu_custom_call.1} parent=1 // pred_fallthru
      _
    // Predicated region
    $region6: #{tpu_custom_call.1} parent=1 // pred_check
      _
    $region7: #{tpu_custom_call.1} parent=1 // pred_check_branch
      %24 = sbr.rel (0) target = $region9
    $region8: #{tpu_custom_call.1} parent=1 // pred_region
      %26 = vsyncadd [#allocation6], 0
      %s28 = sshll.u32 %s1, 4
      %s29 = int_to_ptr.hbm [resolvable:$true] %s28
      %s30 = sshll.u32 [#allocation5], 4
      %s31 = int_to_ptr.vmem [resolvable:$true] %s30
      %33 = dma.hbm_to_vmem [thread:$0]  %s29, 16, %s31, [#allocation6]
    $region9: #{tpu_custom_call.1} parent=1 // pred_fallthru
      _
    // Predicated region
    $region10: #{tpu_custom_call.1} parent=1 // pred_check
      _
    $region11: #{tpu_custom_call.1} parent=1 // pred_check_branch
      %35 = sbr.rel (0) target = $region13
    $region12: #{tpu_custom_call.1} parent=1 // pred_region
      %37 = dma.done [#allocation3], 256
    $region13: #{tpu_custom_call.1} parent=1 // pred_fallthru
      _
    // Predicated region
    $region14: #{tpu_custom_call.1} parent=1 // pred_check
      _
    $region15: #{tpu_custom_call.1} parent=1 // pred_check_branch
      %39 = sbr.rel (0) target = $region17
    $region16: #{tpu_custom_call.1} parent=1 // pred_region
      %41 = dma.done [#allocation6], 16
    $region17: #{tpu_custom_call.1} parent=1 // pred_fallthru
      _
    %v42 = vld [vmem:[#allocation5] sm:$0x1]
    %v43 = vld [vmem:[#allocation2] sm:$0xff]
    %v44 = vld [vmem:[#allocation2 + $0x8] sm:$0xff]
    %vm45 = vcmask 261120
    %v47 = vsel %vm45, %v42, 0
    %v50 = vsel %vm45, %v43, 0
    %v53 = vsel %vm45, %v44, 0
    %55 = vmatpush.xpose.msra.mxu0 0.0
    %56 = vmatpush.xpose.msra.mxu0 0.0
    %57 = vmatpush.xpose.msra.mxu0 0.0
    %58 = vmatpush.xpose.msra.mxu0 0.0
    %59 = vmatpush.xpose.msra.mxu0 0.0
    %60 = vmatpush.xpose.msra.mxu0 0.0
    %61 = vmatpush.xpose.msra.mxu0 0.0
    %62 = vmatpush.xpose.msra.mxu0 0.0
    %63 = vmatpush.xpose.msra.mxu0 0.0
    %64 = vmatpush.xpose.msra.mxu0 0.0
    %65 = vmatpush.xpose.msra.mxu0 0.0
    %66 = vmatpush.xpose.msra.mxu0 0.0
    %67 = vmatpush.xpose.msra.mxu0 0.0
    %68 = vmatpush.xpose.msra.mxu0 0.0
    %69 = vmatpush.xpose.msra.mxu0 %v53
    %70 = vmatpush.xpose.msra.mxu0 %v50
    %71 = vmatmul.f32.gmra.mxu0 %v47
    %v72 = vpop.f32.mrf.mxu0
    %v73 = vadd.f32 0.0, %v72
    %74 = vdwg.mxu0
    %v75 = vxor.u32 %v73, 2147483648
    %v76 = vmul.f32 %v75, 1.442695
    %v77 = vpow.pop %v76
    %v78 = vadd.f32 %v77, 1.0
    %v79 = vrcp.pop %v78
    %v80 = vmul.f32 %v78, %v79
    %v81 = vsub.f32 1.0, %v80
    %v82 = vmul.f32 %v79, %v81
    %v83 = vadd.f32 %v79, %v82
    %vm84 = vweird.f32 %v78
    %vm85 = vweird.f32 %v79
    %vm86 = vmor %vm84, %vm85
    %v87 = vsel %vm86, %v79, %v83
    %v88 = vand.u32 2147483647, %v78
    %vm89 = vcmp.eq.f32.partialorder %v88, 8.507059e+37
    %v90 = vand.u32 %v78, 2147483648
    %v91 = vor.u32 1.1754944e-38, %v90
    %v92 = vsel %vm89, %v91, %v87
    %v93 = vmul.f32 1.0, %v92
    %vm94 = vcmask 122880
    %95 = vst.msk [vmem:[#allocation7] sm:$0x1] %vm94, %v93
    // Predicated region
    $region18: #{tpu_custom_call.1} parent=1 // pred_check
      _
    $region19: #{tpu_custom_call.1} parent=1 // pred_check_branch
      %97 = sbr.rel (0) target = $region21
    $region20: #{tpu_custom_call.1} parent=1 // pred_region
      %99 = vsyncadd [#allocation4], 0
      %s101 = sshll.u32 [#allocation7], 4
      %s102 = int_to_ptr.vmem [resolvable:$true] %s101
      %s103 = sshll.u32 %s2, 4
      %s104 = int_to_ptr.hbm [resolvable:$true] %s103
      %106 = dma.vmem_to_hbm [thread:$0]  %s102, 16, %s104, [#allocation4]
    $region21: #{tpu_custom_call.1} parent=1 // pred_fallthru
      _
    // Predicated region
    $region22: #{tpu_custom_call.1} parent=1 // pred_check
      _
    $region23: #{tpu_custom_call.1} parent=1 // pred_check_branch
      %108 = sbr.rel (0) target = $region25
    $region24: #{tpu_custom_call.1} parent=1 // pred_region
      %110 = dma.done [#allocation4], 16
    $region25: #{tpu_custom_call.1} parent=1 // pred_fallthru
      _
    %111 = vsyncpa [#allocation3], 1
    %112 = vsyncpa [#allocation6], 1
    %113 = vsyncpa [#allocation4], 1

</llo_original>
